<compile_context>
chip_gen: v7x
topology: tpu7x:2x2x1
jax: 0.10.0
libtpu: 0.0.40
codegen_flags: <defaults>
</compile_context>

<pallas_src>
import math
import functools

import jax
import jax.numpy as jnp
from jax.experimental import pallas as pl
from jax.experimental.pallas import tpu as pltpu


# ----------------------------- PE buffer (glue) -----------------------------

def make_sine_pe(input_len: int, emb_dim: int) -> jnp.ndarray:
    """Deterministic sinusoidal PE table, shape (1, input_len, emb_dim)."""
    position = jnp.arange(input_len, dtype=jnp.float32)[:, None]          # (L, 1)
    div_term = jnp.exp(
        jnp.arange(0, emb_dim, 2, dtype=jnp.float32)
        * (-math.log(10000.0) / emb_dim)
    )                                                                     # (E/2,)
    ang = position * div_term                                             # (L, E/2)
    pe = jnp.zeros((input_len, emb_dim), dtype=jnp.float32)
    pe = pe.at[:, 0::2].set(jnp.sin(ang))
    pe = pe.at[:, 1::2].set(jnp.cos(ang))
    return pe[None, :, :]                                                 # (1, L, E)


# ------------------------------ Pallas kernels ------------------------------

def _add_pe_kernel(x_ref, pe_ref, o_ref):
    # eval-mode forward: dropout is identity.
    # pe block is (1, TC) and broadcasts over the row (sublane) dimension.
    o_ref[...] = x_ref[...] + pe_ref[...]


def _add_pe_dropout_kernel(x_ref, pe_ref, bits_ref, o_ref, *,
                           threshold: int, scale: float):
    # training-mode forward: (x + pe) with inverted dropout.
    # bits_ref holds uniform int32 random bits; keep iff bits >= threshold,
    # where threshold is chosen so P(keep) = 1 - rate.
    y = x_ref[...] + pe_ref[...]
    keep = bits_ref[...] >= jnp.int32(threshold)
    o_ref[...] = jnp.where(keep, y * jnp.float32(scale), jnp.float32(0.0))


# --------------------------------- Wrapper ----------------------------------

_MAX_ROW_TILE = 256    # rows (sublane dim) per block
_MAX_COL_TILE = 2048   # lanes per block (multiple of 128)


def _tile_sizes(n_rows: int, n_cols: int):
    # Row tile: full extent if small, else 256 (multiple of 8).
    tb = n_rows if n_rows <= _MAX_ROW_TILE else _MAX_ROW_TILE
    # Column tile: multiple of 128 when possible, else full extent (allowed).
    if n_cols % 128 == 0:
        tc = min(n_cols, _MAX_COL_TILE)
    else:
        tc = n_cols
    return tb, tc


def sine_pe_forward(x, pe, *, dropout_rate: float = 0.1,
                    training: bool = False, rng_key=None):
    """x: (B, L, E) float32, pe: (1, L, E) float32 -> (B, L, E) float32."""
    B, L, E = x.shape
    assert pe.shape == (1, L, E)
    LE = L * E

    # Lane-dense flattening: last dim becomes L*E (multiple of 128 for typical
    # emb dims), so stores are full-width vst instead of masked vst.msk.
    x2 = x.reshape(B, LE)
    pe2 = pe.reshape(1, LE)

    TB, TC = _tile_sizes(B, LE)
    grid = (pl.cdiv(B, TB), pl.cdiv(LE, TC))

    x_spec = pl.BlockSpec((TB, TC), lambda i, j: (i, j))
    pe_spec = pl.BlockSpec((1, TC), lambda i, j: (0, j))   # broadcast over rows
    out_spec = pl.BlockSpec((TB, TC), lambda i, j: (i, j))
    out_shape = jax.ShapeDtypeStruct((B, LE), x.dtype)

    cparams = pltpu.CompilerParams(
        dimension_semantics=("parallel", "parallel"),
        vmem_limit_bytes=48 * 1024 * 1024,
    )

    if (not training) or dropout_rate == 0.0:
        cost = pl.CostEstimate(flops=B * LE, transcendentals=0,
                               bytes_accessed=(2 * B * LE + LE) * 4)
        out2 = pl.pallas_call(
            _add_pe_kernel,
            out_shape=out_shape,
            grid=grid,
            in_specs=[x_spec, pe_spec],
            out_specs=out_spec,
            compiler_params=cparams,
            cost_estimate=cost,
        )(x2, pe2)
        return out2.reshape(B, L, E)

    # ---- training path: inverted dropout ----
    if rng_key is None:
        rng_key = jax.random.PRNGKey(0)

    # TODO(synk): on-chip pltpu.prng_random_bits would avoid streaming a full
    # tensor of mask bits from HBM, but it has no interpret/CPU lowering, so
    # the bits are generated with jax.random and passed in as an int32 input.
    bits_u32 = jax.random.bits(rng_key, (B, LE), dtype=jnp.uint32)
    bits_i32 = jax.lax.bitcast_convert_type(bits_u32, jnp.int32)

    p_keep = 1.0 - float(dropout_rate)
    # bits_i32 is uniform over [-2^31, 2^31); P(bits >= T) = (2^31 - T) / 2^32.
    threshold = int(round(2 ** 31 - p_keep * (2 ** 32)))
    threshold = max(-(2 ** 31), min(threshold, 2 ** 31 - 1))
    scale = 1.0 / p_keep

    kernel = functools.partial(_add_pe_dropout_kernel,
                               threshold=threshold, scale=scale)
    cost = pl.CostEstimate(flops=3 * B * LE, transcendentals=0,
                           bytes_accessed=(3 * B * LE + LE) * 4)
    out2 = pl.pallas_call(
        kernel,
        out_shape=out_shape,
        grid=grid,
        in_specs=[x_spec, pe_spec, x_spec],   # bits share x's tiling
        out_specs=out_spec,
        compiler_params=cparams,
        cost_estimate=cost,
    )(x2, pe2, bits_i32)
    return out2.reshape(B, L, E)


# ----------------------------------- Main ------------------------------------

if __name__ == "__main__":
    # Module hyper-params (params dict in PyTorch): emb_dim, pe_dropout, input_len
    batch = 2
    input_len = 8
    emb_dim = 32
    pe_dropout = 0.1

    key = jax.random.PRNGKey(0)
    kx, kd = jax.random.split(key)
    x = jax.random.normal(kx, (batch, input_len, emb_dim), dtype=jnp.float32)
    pe = make_sine_pe(input_len, emb_dim)

    # Eval-mode forward (dropout = identity): check against pure-JAX reference.
    out_eval = sine_pe_forward(x, pe, dropout_rate=pe_dropout, training=False)
    out_eval = jax.block_until_ready(out_eval)
    ref = x + pe
    assert jnp.allclose(out_eval, ref, atol=1e-6, rtol=1e-6), "eval-mode mismatch"

    # Training-mode forward (inverted dropout with precomputed random bits).
    out_train = sine_pe_forward(x, pe, dropout_rate=pe_dropout,
                                training=True, rng_key=kd)
    out_train = jax.block_until_ready(out_train)
    assert out_train.shape == x.shape
    # Kept entries must equal (x + pe) / (1 - rate); dropped entries are 0.
    scale = 1.0 / (1.0 - pe_dropout)
    kept = out_train != 0.0
    assert jnp.allclose(jnp.where(kept, out_train, 0.0),
                        jnp.where(kept, ref * scale, 0.0),
                        atol=1e-5, rtol=1e-5), "train-mode kept values mismatch"

    print("KERNEL_OK")
</pallas_src>

<mosaic_0001>
module attributes {stable_mosaic.version = 11 : i64} {
  func.func @_add_pe_kernel(%arg0: i32, %arg1: i32, %arg2: memref<2x256xf32, #tpu.memory_space<vmem>>, %arg3: memref<1x256xf32, #tpu.memory_space<vmem>>, %arg4: memref<2x256xf32, #tpu.memory_space<vmem>>) attributes {dimension_semantics = [#tpu.dimension_semantics<parallel>, #tpu.dimension_semantics<parallel>], iteration_bounds = array<i64: 1, 1>, scalar_prefetch = 0 : i64, scratch_operands = 0 : i64, tpu.core_type = #tpu.core_type<tc>, window_params = [{transform_indices = @transform_0, window_bounds = array<i64: 2, 256>}, {transform_indices = @transform_1, window_bounds = array<i64: 1, 256>}, {transform_indices = @transform_2, window_bounds = array<i64: 2, 256>}]} {
    %c0 = arith.constant 0 : index
    %c0_0 = arith.constant 0 : index
    %0 = vector.load %arg2[%c0, %c0_0] : memref<2x256xf32, #tpu.memory_space<vmem>>, vector<2x256xf32>
    %c0_1 = arith.constant 0 : index
    %c0_2 = arith.constant 0 : index
    %1 = vector.load %arg3[%c0_1, %c0_2] : memref<1x256xf32, #tpu.memory_space<vmem>>, vector<1x256xf32>
    %2 = vector.broadcast %1 : vector<1x256xf32> to vector<2x256xf32>
    %3 = arith.addf %0, %2 : vector<2x256xf32>
    %c0_3 = arith.constant 0 : index
    %c0_4 = arith.constant 0 : index
    %4 = vector.load %arg4[%c0_3, %c0_4] : memref<2x256xf32, #tpu.memory_space<vmem>>, vector<2x256xf32>
    tpu.vector_store %arg4[%c0_3, %c0_4], %3 {strides = array<i32>} : memref<2x256xf32, #tpu.memory_space<vmem>>, vector<2x256xf32>,
    return
  }
  func.func @transform_0(%arg0: i32, %arg1: i32) -> (i32, i32) {
    %c0_i32 = arith.constant 0 : i32
    return %arg0, %arg1 : i32, i32
  }
  func.func @transform_1(%arg0: i32, %arg1: i32) -> (i32, i32) {
    %c0_i32 = arith.constant 0 : i32
    %c0_i32_0 = arith.constant 0 : i32
    return %c0_i32, %arg1 : i32, i32
  }
  func.func @transform_2(%arg0: i32, %arg1: i32) -> (i32, i32) {
    %c0_i32 = arith.constant 0 : i32
    return %arg0, %arg1 : i32, i32
  }
}

</mosaic_0001>

<llo_original>
// kernel: tpu_custom_call.1
$region0: #{tpu_custom_call.1}
  #allocation0 [shape = 'u32[]', space=smem, size = 0x4, offset = 0x4, fixed_abs, tag = 'smem constant byte address 0x4 - core index']
  #allocation1 [shape = 'u32[144,128]{1,0:T(1,128)}', space=vmem, size = 0x12000, scoped, tag = 'internal scratch']
  %s0 = inlined_call_operand.hbm [shape: f32[2,256], index: 0, kind: input, shape index: {}]
  %s1 = inlined_call_operand.vmem [shape: f32[1,256], index: 1, kind: input, shape index: {}]
  %s2 = inlined_call_operand.hbm [shape: f32[2,256], index: 2, kind: output, shape index: {}]
  %s3 = sld [smem:[#allocation0]]
  $region22: #{tpu_custom_call.1} parent=0
    _
  %s5 = ssub.s32 1, %s3
  %s6 = scalar_select 0, %s5, %s3
  $region1: #{tpu_custom_call.1} parent=0
    #allocation2 [shape = 'u8[2048]{0}', space=vmem, size = 0x800, scoped, tag = 'input window, operand 0, single buffered']
    #allocation3 [shape = 's32[1]{0}', space=sflag, size = 0x4, scoped, tag = 'scoped memory for tpu_custom_call.1']
    #allocation4 [shape = 's32[1]{0}', space=sflag, size = 0x4, scoped, tag = 'scoped memory for tpu_custom_call.1']
    #allocation5 [shape = 'u8[2048]{0}', space=vmem, size = 0x800, scoped, tag = 'output window, operand 0, single buffered']
    %7 = vsyncpa [#allocation3], 0
    %8 = vsyncpa [#allocation4], 0
    // Predicated region
    $region2: #{tpu_custom_call.1} parent=1 // pred_check
      _
    $region3: #{tpu_custom_call.1} parent=1 // pred_check_branch
      %10 = sbr.rel (0) target = $region5
    $region4: #{tpu_custom_call.1} parent=1 // pred_region
      %s12 = ssub.s32 64, 64
      %13 = vsyncadd [#allocation3], %s12
      %s15 = sshll.u32 [#allocation2], 4
      %s16 = int_to_ptr.vmem [resolvable:$true] %s15
      %18 = dma.hbm_to_vmem [thread:$0]  %s0, 64, %s16, [#allocation3]
    $region5: #{tpu_custom_call.1} parent=1 // pred_fallthru
      _
    // Predicated region
    $region6: #{tpu_custom_call.1} parent=1 // pred_check
      _
    $region7: #{tpu_custom_call.1} parent=1 // pred_check_branch
      %20 = sbr.rel (0) target = $region9
    $region8: #{tpu_custom_call.1} parent=1 // pred_region
      _
    $region9: #{tpu_custom_call.1} parent=1 // pred_fallthru
      _
    // Predicated region
    $region10: #{tpu_custom_call.1} parent=1 // pred_check
      _
    $region11: #{tpu_custom_call.1} parent=1 // pred_check_branch
      %22 = sbr.rel (0) target = $region13
    $region12: #{tpu_custom_call.1} parent=1 // pred_region
      %23 = dma.done [#allocation3], 64
    $region13: #{tpu_custom_call.1} parent=1 // pred_fallthru
      _
    %v24 = vld [vmem:[#allocation2] sm:$0xf]
    %v25 = vld [vmem:[%s1] sm:$0x3]
    %v27 = vlaneseq
    %v28 = vshrl.u32 %v27, 7
    %v29 = vsub.s32 0, %v28
    %v30 = vrot.slane %v25, %v29
    %v31 = vlaneseq
    %v32 = vshrl.u32 %v31, 7
    %v33 = vsub.s32 1, %v32
    %v34 = vrot.slane %v25, %v33
    %v35 = vcombine.low %v30, %v34
    %v37 = vunpack.c.l.s4 1983009808
    %v38 = vunpack.c.0.s8 %v37
    %v39 = vlaneseq
    %v40 = vshrl.u32 %v39, 7
    %v41 = vsub.s32 %v38, %v40
    %v42 = vrot.slane %v35, %v41
    %v44 = vadd.f32 %v24, %v42
    %45 = vst [vmem:[#allocation5] sm:$0xf] %v44
    // Predicated region
    $region14: #{tpu_custom_call.1} parent=1 // pred_check
      _
    $region15: #{tpu_custom_call.1} parent=1 // pred_check_branch
      %47 = sbr.rel (0) target = $region17
    $region16: #{tpu_custom_call.1} parent=1 // pred_region
      %s49 = ssub.s32 64, 64
      %50 = vsyncadd [#allocation4], %s49
      %s52 = sshll.u32 [#allocation5], 4
      %s53 = int_to_ptr.vmem [resolvable:$true] %s52
      %55 = dma.vmem_to_hbm [thread:$0]  %s53, 64, %s2, [#allocation4]
    $region17: #{tpu_custom_call.1} parent=1 // pred_fallthru
      _
    // Predicated region
    $region18: #{tpu_custom_call.1} parent=1 // pred_check
      _
    $region19: #{tpu_custom_call.1} parent=1 // pred_check_branch
      %57 = sbr.rel (0) target = $region21
    $region20: #{tpu_custom_call.1} parent=1 // pred_region
      %58 = dma.done [#allocation4], 64
    $region21: #{tpu_custom_call.1} parent=1 // pred_fallthru
      _
    %59 = vsyncpa [#allocation3], 1
    %60 = vsyncpa [#allocation4], 1

</llo_original>
